<compile_context>
chip_gen: v7x
topology: tpu7x:2x2x1
jax: 0.10.0
libtpu: 0.0.40
codegen_flags: <defaults>
</compile_context>

<pallas_src>
import functools

import jax
import jax.numpy as jnp
from jax.experimental import pallas as pl
from jax.experimental.pallas import tpu as pltpu


def cross_patch_kernel(x_ref, w1_ref, b1_ref, W_ref, blin_ref, a2_ref, beta2_ref,
                       o_ref, *, block_batch):
    # x_ref:    (Bb, N, C) activations in native (batch, patch, channel) layout
    # w1_ref:   (1, C)  folded affine_1 weight  (alpha2 * w1)
    # b1_ref:   (1, C)  folded affine_1 bias    (alpha2 * b1)
    # W_ref:    (N, N)  patch-mixing weight, pre-cast to MXU dtype, VMEM-resident
    # blin_ref: (N, 1)  linear bias over patches (column)
    # a2_ref:   (1, C)  layerscale alpha2 (row)
    # beta2_ref:(1, C)  affine_2 bias (row)
    w1 = w1_ref[...]
    b1 = b1_ref[...]
    W = W_ref[...]
    # Folded output bias alpha2[c]*b_lin[n] + beta2[c], rebuilt once per grid step
    # (rank-1 outer product rides in spare VPU slots; avoids an (N, C) DMA).
    bias = blin_ref[...] * a2_ref[...] + beta2_ref[...]           # (N, C) f32

    # Small static unroll over the batch elements of this block: each is one
    # clean 2-D (N, N) @ (N, C) MXU matmul with f32 accumulate.
    for b in range(block_batch):
        x = x_ref[b]                                              # (N, C) f32
        h = x * w1 + b1                                           # folded affine_1 (+ layerscale)
        z = jnp.dot(W, h.astype(W.dtype),
                    preferred_element_type=jnp.float32)           # (N, C) f32
        o_ref[b] = (z + bias + x).astype(o_ref.dtype)             # folded bias + residual


def _vmem_budget_bytes():
    """~75% of physical VMEM (compiler-scratch headroom); 48 MiB fallback."""
    try:
        cap = int(pltpu.get_tpu_info().vmem_capacity_bytes)
    except Exception:
        cap = 64 << 20          # conservative: v7x per-TC capacity
    return (cap * 3) // 4


def _pick_block_batch(B, N, C, act_itemsize, slab_budget_bytes, max_unroll=8):
    """Largest Bb dividing B that (a) keeps the (Bb, N, C) slab within budget,
    (b) keeps the in-kernel unroll small, and (c) prefers >=2 even grid steps
    (pipeline overlap + v7x dual-TC sharding of the 'parallel' axis)."""
    def ok(cand):
        return (cand <= max_unroll
                and cand * N * C * act_itemsize <= slab_budget_bytes)
    for cand in range(B // 2, 0, -1):            # >=2 steps, even count
        if B % cand == 0 and (B // cand) % 2 == 0 and ok(cand):
            return cand
    for cand in range(B // 2, 0, -1):            # >=2 steps
        if B % cand == 0 and ok(cand):
            return cand
    return B if ok(B) else 1                     # tiny batch: single step


@functools.partial(jax.jit, static_argnames=("block_batch", "use_bf16_matmul"))
def cross_patch_sublayer(x, w1, b1, W, b_lin, alpha2, beta2,
                         *, block_batch=None, use_bf16_matmul=True):
    """x: (B, N, C). Returns (B, N, C) = affine_2(Linear_patches(affine_1(x))) + x."""
    B, N, C = x.shape
    act_itemsize = jnp.dtype(x.dtype).itemsize

    # ---- parameter-only constant folding (tiny, done on device once per call) ----
    w1f = (alpha2 * w1).reshape(1, C)                       # alpha2 * affine_1.weight
    b1f = (alpha2 * b1).reshape(1, C)                       # alpha2 * affine_1.bias
    a2_row = alpha2.reshape(1, C)
    beta2_row = beta2.reshape(1, C)
    blin_col = b_lin.reshape(N, 1)

    mxu_dtype = jnp.bfloat16 if use_bf16_matmul else x.dtype
    W_mxu = W.astype(mxu_dtype)                             # cast ONCE; resident in VMEM

    # ---- VMEM budgeting & batch tiling ------------------------------------------
    vmem_budget = _vmem_budget_bytes()
    resident_bytes = (N * N * jnp.dtype(mxu_dtype).itemsize     # W
                      + (4 * C + N) * 4)                        # small affine vectors
    headroom = 4 << 20
    # 4 pipelined slabs: double-buffered input block + double-buffered output block.
    slab_budget = max((vmem_budget - resident_bytes - headroom) // 4,
                      N * C * act_itemsize)

    if block_batch is None:
        Bb = _pick_block_batch(B, N, C, act_itemsize, slab_budget)
    else:
        Bb = int(block_batch)
        assert B % Bb == 0, "block_batch must divide batch"
    num_blocks = B // Bb

    slab_bytes = Bb * N * C * act_itemsize
    working_set = 4 * slab_bytes + 2 * resident_bytes
    vmem_limit = int(min(max(32 << 20, working_set + headroom), vmem_budget))

    kernel = functools.partial(cross_patch_kernel, block_batch=Bb)

    grid_spec = pltpu.PrefetchScalarGridSpec(
        num_scalar_prefetch=0,
        grid=(num_blocks,),
        in_specs=[
            pl.BlockSpec((Bb, N, C), lambda b: (b, 0, 0)),   # x block (native layout)
            pl.BlockSpec((1, C), lambda b: (0, 0)),          # folded affine_1 weight
            pl.BlockSpec((1, C), lambda b: (0, 0)),          # folded affine_1 bias
            pl.BlockSpec((N, N), lambda b: (0, 0)),          # patch-mixing weight (resident)
            pl.BlockSpec((N, 1), lambda b: (0, 0)),          # b_lin column
            pl.BlockSpec((1, C), lambda b: (0, 0)),          # alpha2 row
            pl.BlockSpec((1, C), lambda b: (0, 0)),          # beta2 row
        ],
        out_specs=pl.BlockSpec((Bb, N, C), lambda b: (b, 0, 0)),
    )

    return pl.pallas_call(
        kernel,
        out_shape=jax.ShapeDtypeStruct((B, N, C), x.dtype),
        grid_spec=grid_spec,
        compiler_params=pltpu.CompilerParams(
            dimension_semantics=("parallel",),
            vmem_limit_bytes=vmem_limit,
        ),
    )(x, w1f, b1f, W_mxu, blin_col, a2_row, beta2_row)


def reference(x, w1, b1, W, b_lin, alpha2, beta2):
    h = x * w1[None, None, :] + b1[None, None, :]                 # affine_1
    # transpose(1,2) -> (B, C, N), Linear over patches, transpose back
    z = jnp.einsum('bnc,mn->bmc', h, W) + b_lin[None, :, None]    # (B, N, C)
    z = alpha2[None, None, :] * z + beta2[None, None, :]          # affine_2 (layerscale)
    return z + x                                                  # residual


if __name__ == "__main__":
    # Shapes consistent with ResMLP defaults: img_size=32, patch_size=4 -> 64 patches,
    # embed_dim=96; small batch of 8.
    B, N_PATCHES, C_CHANNELS = 8, 64, 96
    key = jax.random.PRNGKey(0)
    k_x, k_w1, k_b1, k_W, k_bl = jax.random.split(key, 5)

    x = jax.random.normal(k_x, (B, N_PATCHES, C_CHANNELS), dtype=jnp.float32)

    # affine_1: ModifiedBatchNorm1d folded to per-channel affine (deterministic random)
    w1 = jax.random.normal(k_w1, (C_CHANNELS,), dtype=jnp.float32) * 0.5 + 1.0
    b1 = jax.random.normal(k_b1, (C_CHANNELS,), dtype=jnp.float32) * 0.1

    # nn.Linear(in_patches, in_patches): weight (out, in), bias (out,)
    W = jax.random.normal(k_W, (N_PATCHES, N_PATCHES), dtype=jnp.float32) * (1.0 / N_PATCHES ** 0.5)
    b_lin = jax.random.normal(k_bl, (N_PATCHES,), dtype=jnp.float32) * 0.05

    # affine_2: layerscale init (alpha=0.1, beta=0) as in __init__
    alpha2 = jnp.full((C_CHANNELS,), 0.1, dtype=jnp.float32)
    beta2 = jnp.zeros((C_CHANNELS,), dtype=jnp.float32)

    ref = reference(x, w1, b1, W, b_lin, alpha2, beta2)

    # f32 MXU path, auto batch tile (picks Bb=4 -> 2 even grid steps here).
    out_f32 = cross_patch_sublayer(x, w1, b1, W, b_lin, alpha2, beta2,
                                   block_batch=None, use_bf16_matmul=False)
    out_f32 = jax.block_until_ready(out_f32)
    assert out_f32.shape == (B, N_PATCHES, C_CHANNELS)
    assert jnp.allclose(out_f32, ref, atol=1e-4, rtol=1e-4), "f32 kernel mismatch vs reference"

    # bf16 MXU path (v6e/v7x-friendly), explicit 4-step batch grid to exercise tiling.
    out_bf16 = cross_patch_sublayer(x, w1, b1, W, b_lin, alpha2, beta2,
                                    block_batch=2, use_bf16_matmul=True)
    out_bf16 = jax.block_until_ready(out_bf16)
    assert out_bf16.shape == (B, N_PATCHES, C_CHANNELS)
    assert jnp.allclose(out_bf16, ref, atol=2e-2, rtol=2e-2), "bf16 kernel mismatch vs reference"

    print("KERNEL_OK")
</pallas_src>

<mosaic_0001>
module attributes {stable_mosaic.version = 11 : i64} {
  func.func @cross_patch_kernel(%arg0: i32, %arg1: memref<4x64x96xf32, #tpu.memory_space<vmem>>, %arg2: memref<1x96xf32, #tpu.memory_space<vmem>>, %arg3: memref<1x96xf32, #tpu.memory_space<vmem>>, %arg4: memref<64x64xf32, #tpu.memory_space<vmem>>, %arg5: memref<64x1xf32, #tpu.memory_space<vmem>>, %arg6: memref<1x96xf32, #tpu.memory_space<vmem>>, %arg7: memref<1x96xf32, #tpu.memory_space<vmem>>, %arg8: memref<4x64x96xf32, #tpu.memory_space<vmem>>) attributes {dimension_semantics = [#tpu.dimension_semantics<parallel>], iteration_bounds = array<i64: 2>, scalar_prefetch = 0 : i64, scratch_operands = 0 : i64, tpu.core_type = #tpu.core_type<tc>, window_params = [{transform_indices = @transform_0, window_bounds = array<i64: 4, 64, 96>}, {pipeline_mode = #tpu.pipeline_mode<synchronous>, transform_indices = @transform_1, window_bounds = array<i64: 1, 96>}, {pipeline_mode = #tpu.pipeline_mode<synchronous>, transform_indices = @transform_2, window_bounds = array<i64: 1, 96>}, {pipeline_mode = #tpu.pipeline_mode<synchronous>, transform_indices = @transform_3, window_bounds = array<i64: 64, 64>}, {pipeline_mode = #tpu.pipeline_mode<synchronous>, transform_indices = @transform_4, window_bounds = array<i64: 64, 1>}, {pipeline_mode = #tpu.pipeline_mode<synchronous>, transform_indices = @transform_5, window_bounds = array<i64: 1, 96>}, {pipeline_mode = #tpu.pipeline_mode<synchronous>, transform_indices = @transform_6, window_bounds = array<i64: 1, 96>}, {transform_indices = @transform_7, window_bounds = array<i64: 4, 64, 96>}]} {
    %c0 = arith.constant 0 : index
    %c0_0 = arith.constant 0 : index
    %0 = vector.load %arg2[%c0, %c0_0] : memref<1x96xf32, #tpu.memory_space<vmem>>, vector<1x96xf32>
    %c0_1 = arith.constant 0 : index
    %c0_2 = arith.constant 0 : index
    %1 = vector.load %arg3[%c0_1, %c0_2] : memref<1x96xf32, #tpu.memory_space<vmem>>, vector<1x96xf32>
    %c0_3 = arith.constant 0 : index
    %c0_4 = arith.constant 0 : index
    %2 = vector.load %arg4[%c0_3, %c0_4] : memref<64x64xf32, #tpu.memory_space<vmem>>, vector<64x64xf32>
    %c0_5 = arith.constant 0 : index
    %c0_6 = arith.constant 0 : index
    %3 = vector.load %arg5[%c0_5, %c0_6] : memref<64x1xf32, #tpu.memory_space<vmem>>, vector<64x1xf32>
    %c0_7 = arith.constant 0 : index
    %c0_8 = arith.constant 0 : index
    %4 = vector.load %arg6[%c0_7, %c0_8] : memref<1x96xf32, #tpu.memory_space<vmem>>, vector<1x96xf32>
    %5 = vector.broadcast %3 : vector<64x1xf32> to vector<64x96xf32>
    %6 = vector.broadcast %4 : vector<1x96xf32> to vector<64x96xf32>
    %7 = arith.mulf %5, %6 : vector<64x96xf32>
    %c0_9 = arith.constant 0 : index
    %c0_10 = arith.constant 0 : index
    %8 = vector.load %arg7[%c0_9, %c0_10] : memref<1x96xf32, #tpu.memory_space<vmem>>, vector<1x96xf32>
    %9 = vector.broadcast %8 : vector<1x96xf32> to vector<64x96xf32>
    %10 = arith.addf %7, %9 : vector<64x96xf32>
    %c0_11 = arith.constant 0 : index
    %c0_12 = arith.constant 0 : index
    %c0_13 = arith.constant 0 : index
    %11 = vector.load %arg1[%c0_11, %c0_12, %c0_13] : memref<4x64x96xf32, #tpu.memory_space<vmem>>, vector<1x64x96xf32>
    %12 = vector.shape_cast %11 : vector<1x64x96xf32> to vector<64x96xf32>
    %13 = vector.broadcast %0 : vector<1x96xf32> to vector<64x96xf32>
    %14 = arith.mulf %12, %13 : vector<64x96xf32>
    %15 = vector.broadcast %1 : vector<1x96xf32> to vector<64x96xf32>
    %16 = arith.addf %14, %15 : vector<64x96xf32>
    %cst = arith.constant dense<0.000000e+00> : vector<64x96xf32>
    %17 = tpu.matmul %2, %16, %cst {dimension_numbers = #tpu.dot_dimension_numbers<[1], [0], [0], [1], [0, 0, 1, 1], [], []>} : vector<64x64xf32>, vector<64x96xf32>, vector<64x96xf32> -> vector<64x96xf32>
    %18 = arith.addf %17, %10 : vector<64x96xf32>
    %19 = arith.addf %18, %12 : vector<64x96xf32>
    %c0_14 = arith.constant 0 : index
    %c0_15 = arith.constant 0 : index
    %c0_16 = arith.constant 0 : index
    %20 = vector.load %arg8[%c0_14, %c0_15, %c0_16] : memref<4x64x96xf32, #tpu.memory_space<vmem>>, vector<1x64x96xf32>
    %21 = vector.shape_cast %20 : vector<1x64x96xf32> to vector<64x96xf32>
    %22 = vector.shape_cast %19 : vector<64x96xf32> to vector<1x64x96xf32>
    tpu.vector_store %arg8[%c0_14, %c0_15, %c0_16], %22 {strides = array<i32>} : memref<4x64x96xf32, #tpu.memory_space<vmem>>, vector<1x64x96xf32>,
    %c1 = arith.constant 1 : index
    %c0_17 = arith.constant 0 : index
    %c0_18 = arith.constant 0 : index
    %23 = vector.load %arg1[%c1, %c0_17, %c0_18] : memref<4x64x96xf32, #tpu.memory_space<vmem>>, vector<1x64x96xf32>
    %24 = vector.shape_cast %23 : vector<1x64x96xf32> to vector<64x96xf32>
    %25 = vector.broadcast %0 : vector<1x96xf32> to vector<64x96xf32>
    %26 = arith.mulf %24, %25 : vector<64x96xf32>
    %27 = vector.broadcast %1 : vector<1x96xf32> to vector<64x96xf32>
    %28 = arith.addf %26, %27 : vector<64x96xf32>
    %cst_19 = arith.constant dense<0.000000e+00> : vector<64x96xf32>
    %29 = tpu.matmul %2, %28, %cst_19 {dimension_numbers = #tpu.dot_dimension_numbers<[1], [0], [0], [1], [0, 0, 1, 1], [], []>} : vector<64x64xf32>, vector<64x96xf32>, vector<64x96xf32> -> vector<64x96xf32>
    %30 = arith.addf %29, %10 : vector<64x96xf32>
    %31 = arith.addf %30, %24 : vector<64x96xf32>
    %c1_20 = arith.constant 1 : index
    %c0_21 = arith.constant 0 : index
    %c0_22 = arith.constant 0 : index
    %32 = vector.load %arg8[%c1_20, %c0_21, %c0_22] : memref<4x64x96xf32, #tpu.memory_space<vmem>>, vector<1x64x96xf32>
    %33 = vector.shape_cast %32 : vector<1x64x96xf32> to vector<64x96xf32>
    %34 = vector.shape_cast %31 : vector<64x96xf32> to vector<1x64x96xf32>
    tpu.vector_store %arg8[%c1_20, %c0_21, %c0_22], %34 {strides = array<i32>} : memref<4x64x96xf32, #tpu.memory_space<vmem>>, vector<1x64x96xf32>,
    %c2 = arith.constant 2 : index
    %c0_23 = arith.constant 0 : index
    %c0_24 = arith.constant 0 : index
    %35 = vector.load %arg1[%c2, %c0_23, %c0_24] : memref<4x64x96xf32, #tpu.memory_space<vmem>>, vector<1x64x96xf32>
    %36 = vector.shape_cast %35 : vector<1x64x96xf32> to vector<64x96xf32>
    %37 = vector.broadcast %0 : vector<1x96xf32> to vector<64x96xf32>
    %38 = arith.mulf %36, %37 : vector<64x96xf32>
    %39 = vector.broadcast %1 : vector<1x96xf32> to vector<64x96xf32>
    %40 = arith.addf %38, %39 : vector<64x96xf32>
    %cst_25 = arith.constant dense<0.000000e+00> : vector<64x96xf32>
    %41 = tpu.matmul %2, %40, %cst_25 {dimension_numbers = #tpu.dot_dimension_numbers<[1], [0], [0], [1], [0, 0, 1, 1], [], []>} : vector<64x64xf32>, vector<64x96xf32>, vector<64x96xf32> -> vector<64x96xf32>
    %42 = arith.addf %41, %10 : vector<64x96xf32>
    %43 = arith.addf %42, %36 : vector<64x96xf32>
    %c2_26 = arith.constant 2 : index
    %c0_27 = arith.constant 0 : index
    %c0_28 = arith.constant 0 : index
    %44 = vector.load %arg8[%c2_26, %c0_27, %c0_28] : memref<4x64x96xf32, #tpu.memory_space<vmem>>, vector<1x64x96xf32>
    %45 = vector.shape_cast %44 : vector<1x64x96xf32> to vector<64x96xf32>
    %46 = vector.shape_cast %43 : vector<64x96xf32> to vector<1x64x96xf32>
    tpu.vector_store %arg8[%c2_26, %c0_27, %c0_28], %46 {strides = array<i32>} : memref<4x64x96xf32, #tpu.memory_space<vmem>>, vector<1x64x96xf32>,
    %c3 = arith.constant 3 : index
    %c0_29 = arith.constant 0 : index
    %c0_30 = arith.constant 0 : index
    %47 = vector.load %arg1[%c3, %c0_29, %c0_30] : memref<4x64x96xf32, #tpu.memory_space<vmem>>, vector<1x64x96xf32>
    %48 = vector.shape_cast %47 : vector<1x64x96xf32> to vector<64x96xf32>
    %49 = vector.broadcast %0 : vector<1x96xf32> to vector<64x96xf32>
    %50 = arith.mulf %48, %49 : vector<64x96xf32>
    %51 = vector.broadcast %1 : vector<1x96xf32> to vector<64x96xf32>
    %52 = arith.addf %50, %51 : vector<64x96xf32>
    %cst_31 = arith.constant dense<0.000000e+00> : vector<64x96xf32>
    %53 = tpu.matmul %2, %52, %cst_31 {dimension_numbers = #tpu.dot_dimension_numbers<[1], [0], [0], [1], [0, 0, 1, 1], [], []>} : vector<64x64xf32>, vector<64x96xf32>, vector<64x96xf32> -> vector<64x96xf32>
    %54 = arith.addf %53, %10 : vector<64x96xf32>
    %55 = arith.addf %54, %48 : vector<64x96xf32>
    %c3_32 = arith.constant 3 : index
    %c0_33 = arith.constant 0 : index
    %c0_34 = arith.constant 0 : index
    %56 = vector.load %arg8[%c3_32, %c0_33, %c0_34] : memref<4x64x96xf32, #tpu.memory_space<vmem>>, vector<1x64x96xf32>
    %57 = vector.shape_cast %56 : vector<1x64x96xf32> to vector<64x96xf32>
    %58 = vector.shape_cast %55 : vector<64x96xf32> to vector<1x64x96xf32>
    tpu.vector_store %arg8[%c3_32, %c0_33, %c0_34], %58 {strides = array<i32>} : memref<4x64x96xf32, #tpu.memory_space<vmem>>, vector<1x64x96xf32>,
    return
  }
  func.func @transform_0(%arg0: i32) -> (i32, i32, i32) {
    %c0_i32 = arith.constant 0 : i32
    %c0_i32_0 = arith.constant 0 : i32
    %c0_i32_1 = arith.constant 0 : i32
    return %arg0, %c0_i32, %c0_i32_0 : i32, i32, i32
  }
  func.func @transform_1(%arg0: i32) -> (i32, i32) {
    %c0_i32 = arith.constant 0 : i32
    %c0_i32_0 = arith.constant 0 : i32
    %c0_i32_1 = arith.constant 0 : i32
    return %c0_i32, %c0_i32_0 : i32, i32
  }
  func.func @transform_2(%arg0: i32) -> (i32, i32) {
    %c0_i32 = arith.constant 0 : i32
    %c0_i32_0 = arith.constant 0 : i32
    %c0_i32_1 = arith.constant 0 : i32
    return %c0_i32, %c0_i32_0 : i32, i32
  }
  func.func @transform_3(%arg0: i32) -> (i32, i32) {
    %c0_i32 = arith.constant 0 : i32
    %c0_i32_0 = arith.constant 0 : i32
    %c0_i32_1 = arith.constant 0 : i32
    return %c0_i32, %c0_i32_0 : i32, i32
  }
  func.func @transform_4(%arg0: i32) -> (i32, i32) {
    %c0_i32 = arith.constant 0 : i32
    %c0_i32_0 = arith.constant 0 : i32
    %c0_i32_1 = arith.constant 0 : i32
    return %c0_i32, %c0_i32_0 : i32, i32
  }
  func.func @transform_5(%arg0: i32) -> (i32, i32) {
    %c0_i32 = arith.constant 0 : i32
    %c0_i32_0 = arith.constant 0 : i32
    %c0_i32_1 = arith.constant 0 : i32
    return %c0_i32, %c0_i32_0 : i32, i32
  }
  func.func @transform_6(%arg0: i32) -> (i32, i32) {
    %c0_i32 = arith.constant 0 : i32
    %c0_i32_0 = arith.constant 0 : i32
    %c0_i32_1 = arith.constant 0 : i32
    return %c0_i32, %c0_i32_0 : i32, i32
  }
  func.func @transform_7(%arg0: i32) -> (i32, i32, i32) {
    %c0_i32 = arith.constant 0 : i32
    %c0_i32_0 = arith.constant 0 : i32
    %c0_i32_1 = arith.constant 0 : i32
    return %arg0, %c0_i32, %c0_i32_0 : i32, i32, i32
  }
}

</mosaic_0001>

<llo_original>
// kernel: cross_patch_sublayer.1
$region0: #{cross_patch_sublayer.1}
  #allocation0 [shape = 'u32[]', space=smem, size = 0x4, offset = 0x4, fixed_abs, tag = 'smem constant byte address 0x4 - core index']
  #allocation1 [shape = 'u32[144,128]{1,0:T(1,128)}', space=vmem, size = 0x12000, scoped, tag = 'internal scratch']
  %s0 = inlined_call_operand.hbm [shape: f32[8,64,96], index: 0, kind: input, shape index: {}]
  %s1 = inlined_call_operand.vmem [shape: f32[1,96], index: 1, kind: input, shape index: {}]
  %s2 = inlined_call_operand.vmem [shape: f32[1,96], index: 2, kind: input, shape index: {}]
  %s3 = inlined_call_operand.vmem [shape: f32[64,64], index: 3, kind: input, shape index: {}]
  %s4 = inlined_call_operand.vmem [shape: f32[64,1], index: 4, kind: input, shape index: {}]
  %s5 = inlined_call_operand.vmem [shape: f32[1,96], index: 5, kind: input, shape index: {}]
  %s6 = inlined_call_operand.vmem [shape: f32[1,96], index: 6, kind: input, shape index: {}]
  %s7 = inlined_call_operand.hbm [shape: f32[8,64,96], index: 7, kind: output, shape index: {}]
  %s8 = sld [smem:[#allocation0]]
  $region65: #{cross_patch_sublayer.1} parent=0
    _
  %s10 = ssub.s32 1, %s8
  %s11 = scalar_select 0, %s10, %s8
  $region1: #{cross_patch_sublayer.1} parent=0
    #allocation2 [shape = 'u8[262144]{0}', space=vmem, size = 0x40000, scoped, tag = 'input window, operand 0']
    #allocation3 [shape = 's32[2]{0}', space=sflag, size = 0x8, scoped, tag = 'scoped memory for cross_patch_sublayer.1']
    #allocation4 [shape = 's32[2]{0}', space=sflag, size = 0x8, scoped, tag = 'scoped memory for cross_patch_sublayer.1']
    #allocation5 [shape = 'u8[262144]{0}', space=vmem, size = 0x40000, scoped, tag = 'output window, operand 0']
    %12 = vsyncpa [#allocation3], 0
    %s13 = scalar_lea.sflag [#allocation3], 1
    %14 = vsyncpa %s13, 0
    %15 = vsyncpa [#allocation4], 0
    %s16 = scalar_lea.sflag [#allocation4], 1
    %17 = vsyncpa %s16, 0
    loop: start=0, step=1, limit=4
    $region2: #{cross_patch_sublayer.1} parent=1 // loop_pre_header
      _
    $region3: #{cross_patch_sublayer.1} parent=1 // loop_header
      %s19 = sphi 0, %s23
      %p20 = scmp.ge.s32.totalorder %s19, 4
      %s29 = sphi 0, %s31
      %s32 = sphi 0, %s29
      %s33 = sphi 0, %s32
      %s49 = sphi 0, %s33
      %s53 = sphi 0, %s53
      %s55 = sphi 0, %s53
      %s56 = sphi 0, %s55
      %s70 = sphi 0, %s56
      %s74 = sphi 0, %s74
      %s76 = sphi 0, %s74
      %s77 = sphi 0, %s76
      %s91 = sphi 0, %s77
      %s95 = sphi 0, %s95
      %s97 = sphi 0, %s95
      %s98 = sphi 0, %s97
      %s112 = sphi 0, %s98
      %s116 = sphi 0, %s116
      %s118 = sphi 0, %s116
      %s119 = sphi 0, %s118
      %s133 = sphi 0, %s119
      %s137 = sphi 0, %s137
      %s139 = sphi 0, %s137
      %s140 = sphi 0, %s139
      %s154 = sphi 0, %s140
      %s158 = sphi 0, %s158
      %s160 = sphi 0, %s158
      %s161 = sphi 0, %s160
      %s175 = sphi 0, %s161
      %s181 = sphi 0, %s183
      %s184 = sphi 0, %s181
      %s185 = sphi 0, %s184
      %s201 = sphi 0, %s185
    $region4: #{cross_patch_sublayer.1} parent=1 // loop_header_branch
      %22 = sbr.rel (%p20) target = $region8
    $region5: #{cross_patch_sublayer.1} parent=1 // loop_body
      %s24 = ssub.s32 %s19, 1
      %s25 = ssub.s32 %s19, 2
      %s26 = sadd.s32 %s19, 1
      %s27 = ssub.s32 %s19, %s26
      %p28 = scmp.eq.s32.totalorder %s27, 0
      %s30 = sadd.s32 %s29, 1
      %s31 = scalar_select %p28, %s29, %s30
      %p34 = pneg %p28
      %p35 = scmp.eq.s32.totalorder %s19, 1
      %p36 = por %p34, %p35
      %p37 = scmp.ne.s32.totalorder %s29, %s32
      %p38 = scmp.eq.s32.totalorder %s19, 0
      %p39 = por %p37, %p38
      %p40 = scmp.ne.s32.totalorder %s29, %s32
      %p41 = scmp.eq.s32.totalorder %s24, 1
      %p42 = por %p40, %p41
      %p43 = scmp.ne.s32.totalorder %s32, %s33
      %p44 = scmp.eq.s32.totalorder %s24, 0
      %p45 = por %p43, %p44
      %p46 = scmp.ne.s32.totalorder %s32, %s33
      %p47 = scmp.eq.s32.totalorder %s25, 1
      %p48 = por %p46, %p47
      %p50 = scmp.ne.s32.totalorder %s33, %s49
      %p51 = scmp.eq.s32.totalorder %s25, 0
      %p52 = por %p50, %p51
      %s54 = sadd.s32 %s53, 1
      %p57 = scmp.eq.s32.totalorder %s19, 1
      %p58 = scmp.ne.s32.totalorder %s53, %s55
      %p59 = scmp.eq.s32.totalorder %s19, 0
      %p60 = por %p58, %p59
      %p61 = scmp.ne.s32.totalorder %s53, %s55
      %p62 = scmp.eq.s32.totalorder %s24, 1
      %p63 = por %p61, %p62
      %p64 = scmp.ne.s32.totalorder %s55, %s56
      %p65 = scmp.eq.s32.totalorder %s24, 0
      %p66 = por %p64, %p65
      %p67 = scmp.ne.s32.totalorder %s55, %s56
      %p68 = scmp.eq.s32.totalorder %s25, 1
      %p69 = por %p67, %p68
      %p71 = scmp.ne.s32.totalorder %s56, %s70
      %p72 = scmp.eq.s32.totalorder %s25, 0
      %p73 = por %p71, %p72
      %s75 = sadd.s32 %s74, 1
      %p78 = scmp.eq.s32.totalorder %s19, 1
      %p79 = scmp.ne.s32.totalorder %s74, %s76
      %p80 = scmp.eq.s32.totalorder %s19, 0
      %p81 = por %p79, %p80
      %p82 = scmp.ne.s32.totalorder %s74, %s76
      %p83 = scmp.eq.s32.totalorder %s24, 1
      %p84 = por %p82, %p83
      %p85 = scmp.ne.s32.totalorder %s76, %s77
      %p86 = scmp.eq.s32.totalorder %s24, 0
      %p87 = por %p85, %p86
      %p88 = scmp.ne.s32.totalorder %s76, %s77
      %p89 = scmp.eq.s32.totalorder %s25, 1
      %p90 = por %p88, %p89
      %p92 = scmp.ne.s32.totalorder %s77, %s91
      %p93 = scmp.eq.s32.totalorder %s25, 0
      %p94 = por %p92, %p93
      %s96 = sadd.s32 %s95, 1
      %p99 = scmp.eq.s32.totalorder %s19, 1
      %p100 = scmp.ne.s32.totalorder %s95, %s97
      %p101 = scmp.eq.s32.totalorder %s19, 0
      %p102 = por %p100, %p101
      %p103 = scmp.ne.s32.totalorder %s95, %s97
      %p104 = scmp.eq.s32.totalorder %s24, 1
      %p105 = por %p103, %p104
      %p106 = scmp.ne.s32.totalorder %s97, %s98
      %p107 = scmp.eq.s32.totalorder %s24, 0
      %p108 = por %p106, %p107
      %p109 = scmp.ne.s32.totalorder %s97, %s98
      %p110 = scmp.eq.s32.totalorder %s25, 1
      %p111 = por %p109, %p110
      %p113 = scmp.ne.s32.totalorder %s98, %s112
      %p114 = scmp.eq.s32.totalorder %s25, 0
      %p115 = por %p113, %p114
      %s117 = sadd.s32 %s116, 1
      %p120 = scmp.eq.s32.totalorder %s19, 1
      %p121 = scmp.ne.s32.totalorder %s116, %s118
      %p122 = scmp.eq.s32.totalorder %s19, 0
      %p123 = por %p121, %p122
      %p124 = scmp.ne.s32.totalorder %s116, %s118
      %p125 = scmp.eq.s32.totalorder %s24, 1
      %p126 = por %p124, %p125
      %p127 = scmp.ne.s32.totalorder %s118, %s119
      %p128 = scmp.eq.s32.totalorder %s24, 0
      %p129 = por %p127, %p128
      %p130 = scmp.ne.s32.totalorder %s118, %s119
      %p131 = scmp.eq.s32.totalorder %s25, 1
      %p132 = por %p130, %p131
      %p134 = scmp.ne.s32.totalorder %s119, %s133
      %p135 = scmp.eq.s32.totalorder %s25, 0
      %p136 = por %p134, %p135
      %s138 = sadd.s32 %s137, 1
      %p141 = scmp.eq.s32.totalorder %s19, 1
      %p142 = scmp.ne.s32.totalorder %s137, %s139
      %p143 = scmp.eq.s32.totalorder %s19, 0
      %p144 = por %p142, %p143
      %p145 = scmp.ne.s32.totalorder %s137, %s139
      %p146 = scmp.eq.s32.totalorder %s24, 1
      %p147 = por %p145, %p146
      %p148 = scmp.ne.s32.totalorder %s139, %s140
      %p149 = scmp.eq.s32.totalorder %s24, 0
      %p150 = por %p148, %p149
      %p151 = scmp.ne.s32.totalorder %s139, %s140
      %p152 = scmp.eq.s32.totalorder %s25, 1
      %p153 = por %p151, %p152
      %p155 = scmp.ne.s32.totalorder %s140, %s154
      %p156 = scmp.eq.s32.totalorder %s25, 0
      %p157 = por %p155, %p156
      %s159 = sadd.s32 %s158, 1
      %p162 = scmp.eq.s32.totalorder %s19, 1
      %p163 = scmp.ne.s32.totalorder %s158, %s160
      %p164 = scmp.eq.s32.totalorder %s19, 0
      %p165 = por %p163, %p164
      %p166 = scmp.ne.s32.totalorder %s158, %s160
      %p167 = scmp.eq.s32.totalorder %s24, 1
      %p168 = por %p166, %p167
      %p169 = scmp.ne.s32.totalorder %s160, %s161
      %p170 = scmp.eq.s32.totalorder %s24, 0
      %p171 = por %p169, %p170
      %p172 = scmp.ne.s32.totalorder %s160, %s161
      %p173 = scmp.eq.s32.totalorder %s25, 1
      %p174 = por %p172, %p173
      %p176 = scmp.ne.s32.totalorder %s161, %s175
      %p177 = scmp.eq.s32.totalorder %s25, 0
      %p178 = por %p176, %p177
      %s179 = ssub.s32 %s19, %s26
      %p180 = scmp.eq.s32.totalorder %s179, 0
      %s182 = sadd.s32 %s181, 1
      %s183 = scalar_select %p180, %s181, %s182
      %p186 = pneg %p180
      %p187 = scmp.eq.s32.totalorder %s19, 1
      %p188 = por %p186, %p187
      %p189 = scmp.ne.s32.totalorder %s181, %s184
      %p190 = scmp.eq.s32.totalorder %s19, 0
      %p191 = por %p189, %p190
      %p192 = scmp.ne.s32.totalorder %s181, %s184
      %p193 = scmp.eq.s32.totalorder %s24, 1
      %p194 = por %p192, %p193
      %p195 = scmp.ne.s32.totalorder %s184, %s185
      %p196 = scmp.eq.s32.totalorder %s24, 0
      %p197 = por %p195, %p196
      %p198 = scmp.ne.s32.totalorder %s184, %s185
      %p199 = scmp.eq.s32.totalorder %s25, 1
      %p200 = por %p198, %p199
      %p202 = scmp.ne.s32.totalorder %s185, %s201
      %p203 = scmp.eq.s32.totalorder %s25, 0
      %p204 = por %p202, %p203
      %p205 = scmp.le.s32.totalorder 1, %s19
      %p206 = scmp.lt.s32.totalorder %s19, 3
      %p207 = pnand %p205, %p206
      %p208 = pneg %p207
      // Predicated region
      $region9: #{cross_patch_sublayer.1} parent=5 // pred_check
        _
      $region10: #{cross_patch_sublayer.1} parent=5 // pred_check_branch
        %210 = sbr.rel (%p207) target = $region12
      $region11: #{cross_patch_sublayer.1} parent=5 // pred_region
        %s211 = ssub.s32 %s19, 1
        // Predicated region
        $region13: #{cross_patch_sublayer.1} parent=11 // pred_check
          %p212 = pneg %p66
        $region14: #{cross_patch_sublayer.1} parent=11 // pred_check_branch
          %214 = sbr.rel (%p212) target = $region16
        $region15: #{cross_patch_sublayer.1} parent=11 // pred_region
          _
        $region16: #{cross_patch_sublayer.1} parent=11 // pred_fallthru
          _
        // Predicated region
        $region17: #{cross_patch_sublayer.1} parent=11 // pred_check
          %p215 = pneg %p87
        $region18: #{cross_patch_sublayer.1} parent=11 // pred_check_branch
          %217 = sbr.rel (%p215) target = $region20
        $region19: #{cross_patch_sublayer.1} parent=11 // pred_region
          _
        $region20: #{cross_patch_sublayer.1} parent=11 // pred_fallthru
          _
        // Predicated region
        $region21: #{cross_patch_sublayer.1} parent=11 // pred_check
          %p218 = pneg %p108
        $region22: #{cross_patch_sublayer.1} parent=11 // pred_check_branch
          %220 = sbr.rel (%p218) target = $region24
        $region23: #{cross_patch_sublayer.1} parent=11 // pred_region
          _
        $region24: #{cross_patch_sublayer.1} parent=11 // pred_fallthru
          _
        // Predicated region
        $region25: #{cross_patch_sublayer.1} parent=11 // pred_check
          %p221 = pneg %p129
        $region26: #{cross_patch_sublayer.1} parent=11 // pred_check_branch
          %223 = sbr.rel (%p221) target = $region28
        $region27: #{cross_patch_sublayer.1} parent=11 // pred_region
          _
        $region28: #{cross_patch_sublayer.1} parent=11 // pred_fallthru
          _
        // Predicated region
        $region29: #{cross_patch_sublayer.1} parent=11 // pred_check
          %p224 = pneg %p150
        $region30: #{cross_patch_sublayer.1} parent=11 // pred_check_branch
          %226 = sbr.rel (%p224) target = $region32
        $region31: #{cross_patch_sublayer.1} parent=11 // pred_region
          _
        $region32: #{cross_patch_sublayer.1} parent=11 // pred_fallthru
          _
        // Predicated region
        $region33: #{cross_patch_sublayer.1} parent=11 // pred_check
          %p227 = pneg %p171
        $region34: #{cross_patch_sublayer.1} parent=11 // pred_check_branch
          %229 = sbr.rel (%p227) target = $region36
        $region35: #{cross_patch_sublayer.1} parent=11 // pred_region
          _
        $region36: #{cross_patch_sublayer.1} parent=11 // pred_fallthru
          _
      $region12: #{cross_patch_sublayer.1} parent=5 // pred_fallthru
        _
      %p230 = scmp.lt.s32.totalorder %s19, 2
      // Predicated region
      $region37: #{cross_patch_sublayer.1} parent=5 // pred_check
        %p231 = pneg %p230
      $region38: #{cross_patch_sublayer.1} parent=5 // pred_check_branch
        %233 = sbr.rel (%p231) target = $region40
      $region39: #{cross_patch_sublayer.1} parent=5 // pred_region
        // Predicated region
        $region41: #{cross_patch_sublayer.1} parent=39 // pred_check
          %p234 = pneg %p39
        $region42: #{cross_patch_sublayer.1} parent=39 // pred_check_branch
          %236 = sbr.rel (%p234) target = $region44
        $region43: #{cross_patch_sublayer.1} parent=39 // pred_region
          %s237 = sand.u32 %s29, 1
          %s238 = scalar_lea.sflag [#allocation3], %s237
          %s239 = sand.u32 %s29, 1
          %s240 = smul.addr %s239, 256
          %s241 = scalar_lea.vmem [#allocation2], %s240
          %s242 = smul.u32 4, %s19
          %s244 = ssub.s32 4096, 4096
          %245 = vsyncadd %s238, %s244
          %s246 = smul.addr %s242, 8
          %s247 = smul.addr %s246, 128
          %s248 = scalar_lea.hbm %s0, %s247
          %s249 = sshll.u32 %s241, 4
          %s250 = int_to_ptr.vmem [resolvable:$true] %s249
          %255 = dma.hbm_to_vmem [thread:$0]  %s248, 4096, %s250, %s238, 128, 128, 8
        $region44: #{cross_patch_sublayer.1} parent=39 // pred_fallthru
          _
      $region40: #{cross_patch_sublayer.1} parent=5 // pred_fallthru
        _
      %p256 = scmp.le.s32.totalorder 1, %s19
      %p257 = scmp.lt.s32.totalorder %s19, 3
      %p258 = pnand %p256, %p257
      %p259 = pneg %p258
      // Predicated region
      $region45: #{cross_patch_sublayer.1} parent=5 // pred_check
        _
      $region46: #{cross_patch_sublayer.1} parent=5 // pred_check_branch
        %261 = sbr.rel (%p258) target = $region48
      $region47: #{cross_patch_sublayer.1} parent=5 // pred_region
        %s262 = ssub.s32 %s19, 1
        %s263 = sand.u32 %s32, 1
        %s264 = scalar_lea.sflag [#allocation3], %s263
        %s265 = sand.u32 %s32, 1
        %s266 = smul.addr %s265, 256
        %s267 = scalar_lea.vmem [#allocation2], %s266
        // Predicated region
        $region49: #{cross_patch_sublayer.1} parent=47 // pred_check
          %p268 = pneg %p45
        $region50: #{cross_patch_sublayer.1} parent=47 // pred_check_branch
          %270 = sbr.rel (%p268) target = $region52
        $region51: #{cross_patch_sublayer.1} parent=47 // pred_region
          %271 = dma.done %s264, 4096
        $region52: #{cross_patch_sublayer.1} parent=47 // pred_fallthru
          _
        %s272 = sand.u32 %s32, 1
        %s273 = scalar_lea.sflag [#allocation3], %s272
        %s274 = sand.u32 %s32, 1
        %s275 = smul.addr %s274, 256
        %s276 = scalar_lea.vmem [#allocation2], %s275
        %p277 = pneg %p45
        %p278 = pneg %p42
        %p279 = pneg %p66
        %p280 = pneg %p63
        %p281 = pneg %p87
        %p282 = pneg %p84
        %p283 = pneg %p108
        %p284 = pneg %p105
        %p285 = pneg %p129
        %p286 = pneg %p126
        %p287 = pneg %p150
        %p288 = pneg %p147
        %p289 = pneg %p171
        %p290 = pneg %p168
        %p291 = pneg %p197
        %p292 = pneg %p194
        %s293 = sand.u32 %s184, 1
        %s294 = scalar_lea.sflag [#allocation4], %s293
        %s295 = sand.u32 %s184, 1
        %s296 = smul.addr %s295, 256
        %s297 = scalar_lea.vmem [#allocation5], %s296
        %s298 = smul.u32 4, %s24
        %s299 = smul.u32 4, %s24
        %v300 = vld [vmem:[%s1] sm:$0x1]
        %v301 = vld [vmem:[%s2] sm:$0x1]
        %v302 = vld [vmem:[%s3] sm:$0xff]
        %v303 = vld [vmem:[%s3 + $0x8] sm:$0xff]
        %v304 = vld [vmem:[%s3 + $0x10] sm:$0xff]
        %v305 = vld [vmem:[%s3 + $0x18] sm:$0xff]
        %v306 = vld [vmem:[%s3 + $0x20] sm:$0xff]
        %v307 = vld [vmem:[%s3 + $0x28] sm:$0xff]
        %v308 = vld [vmem:[%s3 + $0x30] sm:$0xff]
        %v309 = vld [vmem:[%s3 + $0x38] sm:$0xff]
        %v310 = vld [vmem:[%s4] sm:$0xff]
        %v311 = vld [vmem:[%s4 + $0x8] sm:$0xff]
        %v312 = vld [vmem:[%s4 + $0x10] sm:$0xff]
        %v313 = vld [vmem:[%s4 + $0x18] sm:$0xff]
        %v314 = vld [vmem:[%s4 + $0x20] sm:$0xff]
        %v315 = vld [vmem:[%s4 + $0x28] sm:$0xff]
        %v316 = vld [vmem:[%s4 + $0x30] sm:$0xff]
        %v317 = vld [vmem:[%s4 + $0x38] sm:$0xff]
        %v318 = vld [vmem:[%s5] sm:$0x1]
        %320 = vset.pattern.permute.xlu0 0
        %321 = vperm.xlu0 %320, %v310
        %v322 = vpop.permute.xlu0 %321
        %325 = vset.pattern.permute.xlu0 0
        %326 = vperm.xlu0 %325, %v311
        %v327 = vpop.permute.xlu0 %326
        %330 = vset.pattern.permute.xlu0 0
        %331 = vperm.xlu0 %330, %v312
        %v332 = vpop.permute.xlu0 %331
        %335 = vset.pattern.permute.xlu0 0
        %336 = vperm.xlu0 %335, %v313
        %v337 = vpop.permute.xlu0 %336
        %340 = vset.pattern.permute.xlu0 0
        %341 = vperm.xlu0 %340, %v314
        %v342 = vpop.permute.xlu0 %341
        %345 = vset.pattern.permute.xlu0 0
        %346 = vperm.xlu0 %345, %v315
        %v347 = vpop.permute.xlu0 %346
        %350 = vset.pattern.permute.xlu0 0
        %351 = vperm.xlu0 %350, %v316
        %v352 = vpop.permute.xlu0 %351
        %355 = vset.pattern.permute.xlu0 0
        %356 = vperm.xlu0 %355, %v317
        %v357 = vpop.permute.xlu0 %356
        %v360 = vlaneseq
        %v361 = vshrl.u32 %v360, 7
        %v362 = vsub.s32 0, %v361
        %v363 = vrot.slane %v318, %v362
        %v365 = vmul.f32 %v322, %v363
        %v366 = vmul.f32 %v327, %v363
        %v367 = vmul.f32 %v332, %v363
        %v368 = vmul.f32 %v337, %v363
        %v369 = vmul.f32 %v342, %v363
        %v370 = vmul.f32 %v347, %v363
        %v371 = vmul.f32 %v352, %v363
        %v372 = vmul.f32 %v357, %v363
        %v373 = vld [vmem:[%s6] sm:$0x1]
        %v375 = vlaneseq
        %v376 = vshrl.u32 %v375, 7
        %v377 = vsub.s32 0, %v376
        %v378 = vrot.slane %v373, %v377
        %v380 = vadd.f32 %v365, %v378
        %v381 = vadd.f32 %v366, %v378
        %v382 = vadd.f32 %v367, %v378
        %v383 = vadd.f32 %v368, %v378
        %v384 = vadd.f32 %v369, %v378
        %v385 = vadd.f32 %v370, %v378
        %v386 = vadd.f32 %v371, %v378
        %v387 = vadd.f32 %v372, %v378
        %v388 = vld [vmem:[%s267] sm:$0xff]
        %v389 = vld [vmem:[%s267 + $0x8] sm:$0xff]
        %v390 = vld [vmem:[%s267 + $0x10] sm:$0xff]
        %v391 = vld [vmem:[%s267 + $0x18] sm:$0xff]
        %v392 = vld [vmem:[%s267 + $0x20] sm:$0xff]
        %v393 = vld [vmem:[%s267 + $0x28] sm:$0xff]
        %v394 = vld [vmem:[%s267 + $0x30] sm:$0xff]
        %v395 = vld [vmem:[%s267 + $0x38] sm:$0xff]
        %v397 = vlaneseq
        %v398 = vshrl.u32 %v397, 7
        %v399 = vsub.s32 0, %v398
        %v400 = vrot.slane %v300, %v399
        %v402 = vmul.f32 %v388, %v400
        %v403 = vmul.f32 %v389, %v400
        %v404 = vmul.f32 %v390, %v400
        %v405 = vmul.f32 %v391, %v400
        %v406 = vmul.f32 %v392, %v400
        %v407 = vmul.f32 %v393, %v400
        %v408 = vmul.f32 %v394, %v400
        %v409 = vmul.f32 %v395, %v400
        %v411 = vlaneseq
        %v412 = vshrl.u32 %v411, 7
        %v413 = vsub.s32 0, %v412
        %v414 = vrot.slane %v301, %v413
        %v416 = vadd.f32 %v402, %v414
        %v417 = vadd.f32 %v403, %v414
        %v418 = vadd.f32 %v404, %v414
        %v419 = vadd.f32 %v405, %v414
        %v420 = vadd.f32 %v406, %v414
        %v421 = vadd.f32 %v407, %v414
        %v422 = vadd.f32 %v408, %v414
        %v423 = vadd.f32 %v409, %v414
        %vm424 = vcmask 523264
        %v426 = vsel %vm424, %v302, 0
        %v429 = vsel %vm424, %v303, 0
        %v432 = vsel %vm424, %v304, 0
        %v435 = vsel %vm424, %v305, 0
        %v438 = vsel %vm424, %v306, 0
        %v441 = vsel %vm424, %v307, 0
        %v444 = vsel %vm424, %v308, 0
        %v447 = vsel %vm424, %v309, 0
        %449 = vmatprep.subr.mxu0 0.0
        %450 = vmatpush1.msra.mxu0 %v416
        %451 = vmatprep.subr.mxu0 0.0
        %452 = vmatpush1.msra.mxu0 %v417
        %453 = vmatprep.subr.mxu0 0.0
        %454 = vmatpush1.msra.mxu0 %v418
        %455 = vmatprep.subr.mxu0 0.0
        %456 = vmatpush1.msra.mxu0 %v419
        %457 = vmatprep.subr.mxu0 0.0
        %458 = vmatpush1.msra.mxu0 %v420
        %459 = vmatprep.subr.mxu0 0.0
        %460 = vmatpush1.msra.mxu0 %v421
        %461 = vmatprep.subr.mxu0 0.0
        %462 = vmatpush1.msra.mxu0 %v422
        %463 = vmatprep.subr.mxu0 0.0
        %464 = vmatpush1.msra.mxu0 %v423
        %465 = vmatprep.subr.mxu0 0.0
        %466 = vmatpush1.msra.mxu0 0.0
        %467 = vmatprep.subr.mxu0 0.0
        %468 = vmatpush1.msra.mxu0 0.0
        %469 = vmatprep.subr.mxu0 0.0
        %470 = vmatpush1.msra.mxu0 0.0
        %471 = vmatprep.subr.mxu0 0.0
        %472 = vmatpush1.msra.mxu0 0.0
        %473 = vmatprep.subr.mxu0 0.0
        %474 = vmatpush1.msra.mxu0 0.0
        %475 = vmatprep.subr.mxu0 0.0
        %476 = vmatpush1.msra.mxu0 0.0
        %477 = vmatprep.subr.mxu0 0.0
        %478 = vmatpush1.msra.mxu0 0.0
        %479 = vmatprep.subr.mxu0 0.0
        %480 = vmatpush1.msra.mxu0 0.0
        %481 = vmatprep.subr.mxu0 0.0
        %482 = vmatpush1.msra.mxu0 0.0
        %483 = vmatprep.subr.mxu0 0.0
        %484 = vmatpush1.msra.mxu0 0.0
        %485 = vmatprep.subr.mxu0 0.0
        %486 = vmatpush1.msra.mxu0 0.0
        %487 = vmatprep.subr.mxu0 0.0
        %488 = vmatpush1.msra.mxu0 0.0
        %489 = vmatprep.subr.mxu0 0.0
        %490 = vmatpush1.msra.mxu0 0.0
        %491 = vmatprep.subr.mxu0 0.0
        %492 = vmatpush1.msra.mxu0 0.0
        %493 = vmatprep.subr.mxu0 0.0
        %494 = vmatpush1.msra.mxu0 0.0
        %495 = vmatprep.subr.mxu0 0.0
        %496 = vmatpush1.msra.mxu0 0.0
        %497 = vmatprep.subr.mxu0 0.0
        %498 = vmatpush1.msra.mxu0 0.0
        %499 = vmatprep.subr.mxu0 0.0
        %500 = vmatpush1.msra.mxu0 0.0
        %501 = vmatprep.subr.mxu0 0.0
        %502 = vmatpush1.msra.mxu0 0.0
        %503 = vmatprep.subr.mxu0 0.0
        %504 = vmatpush1.msra.mxu0 0.0
        %505 = vmatprep.subr.mxu0 0.0
        %506 = vmatpush1.msra.mxu0 0.0
        %507 = vmatprep.subr.mxu0 0.0
        %508 = vmatpush1.msra.mxu0 0.0
        %509 = vmatprep.subr.mxu0 0.0
        %510 = vmatpush1.msra.mxu0 0.0
        %511 = vmatprep.subr.mxu0 0.0
        %512 = vmatpush1.msra.mxu0 0.0
        %513 = vmatprep.mubr.f32.mxu0 0.0
        %514 = vmatmul.mubr.f32.gmra.mrb[0].mxu0 %v426
        %v515 = vpop.f32.mrb[0].mxu0
        %v516 = vadd.f32 %v380, %v515
        %v517 = vpop.f32.mrb[0].mxu0
        %518 = vmatprep.mubr.f32.mxu0 0.0
        %519 = vmatmul.mubr.f32.gmra.mrb[0].mxu0 %v429
        %v520 = vpop.f32.mrb[0].mxu0
        %v521 = vadd.f32 %v381, %v520
        %v522 = vpop.f32.mrb[0].mxu0
        %523 = vmatprep.mubr.f32.mxu0 0.0
        %524 = vmatmul.mubr.f32.gmra.mrb[0].mxu0 %v432
        %v525 = vpop.f32.mrb[0].mxu0
        %v526 = vadd.f32 %v382, %v525
        %v527 = vpop.f32.mrb[0].mxu0
        %528 = vmatprep.mubr.f32.mxu0 0.0
        %529 = vmatmul.mubr.f32.gmra.mrb[0].mxu0 %v435
        %v530 = vpop.f32.mrb[0].mxu0
        %v531 = vadd.f32 %v383, %v530
        %v532 = vpop.f32.mrb[0].mxu0
        %533 = vmatprep.mubr.f32.mxu0 0.0
        %534 = vmatmul.mubr.f32.gmra.mrb[0].mxu0 %v438
        %v535 = vpop.f32.mrb[0].mxu0
        %v536 = vadd.f32 %v384, %v535
        %v537 = vpop.f32.mrb[0].mxu0
        %538 = vmatprep.mubr.f32.mxu0 0.0
        %539 = vmatmul.mubr.f32.gmra.mrb[0].mxu0 %v441
        %v540 = vpop.f32.mrb[0].mxu0
        %v541 = vadd.f32 %v385, %v540
        %v542 = vpop.f32.mrb[0].mxu0
        %543 = vmatprep.mubr.f32.mxu0 0.0
        %544 = vmatmul.mubr.f32.gmra.mrb[0].mxu0 %v444
        %v545 = vpop.f32.mrb[0].mxu0
        %v546 = vadd.f32 %v386, %v545
        %v547 = vpop.f32.mrb[0].mxu0
        %548 = vmatprep.mubr.f32.mxu0 0.0
        %549 = vmatmul.mubr.f32.gmra.mrb[0].mxu0 %v447
        %v550 = vpop.f32.mrb[0].mxu0
        %v551 = vadd.f32 %v387, %v550
        %v552 = vpop.f32.mrb[0].mxu0
        %553 = vdwg.mxu0
        %v554 = vadd.f32 %v516, %v388
        %v555 = vadd.f32 %v521, %v389
        %v556 = vadd.f32 %v526, %v390
        %v557 = vadd.f32 %v531, %v391
        %v558 = vadd.f32 %v536, %v392
        %v559 = vadd.f32 %v541, %v393
        %v560 = vadd.f32 %v546, %v394
        %v561 = vadd.f32 %v551, %v395
        %vm562 = vcmask 785408
        %563 = vst.msk [vmem:[%s297] sm:$0xff] %vm562, %v554
        %564 = vst.msk [vmem:[%s297 + $0x8] sm:$0xff] %vm562, %v555
        %565 = vst.msk [vmem:[%s297 + $0x10] sm:$0xff] %vm562, %v556
        %566 = vst.msk [vmem:[%s297 + $0x18] sm:$0xff] %vm562, %v557
        %567 = vst.msk [vmem:[%s297 + $0x20] sm:$0xff] %vm562, %v558
        %568 = vst.msk [vmem:[%s297 + $0x28] sm:$0xff] %vm562, %v559
        %569 = vst.msk [vmem:[%s297 + $0x30] sm:$0xff] %vm562, %v560
        %570 = vst.msk [vmem:[%s297 + $0x38] sm:$0xff] %vm562, %v561
        %s571 = scalar_lea.vmem %s267, 64 [#allocation2]
        %v572 = vld [vmem:[%s571] sm:$0xff]
        %v573 = vld [vmem:[%s571 + $0x8] sm:$0xff]
        %v574 = vld [vmem:[%s571 + $0x10] sm:$0xff]
        %v575 = vld [vmem:[%s571 + $0x18] sm:$0xff]
        %v576 = vld [vmem:[%s571 + $0x20] sm:$0xff]
        %v577 = vld [vmem:[%s571 + $0x28] sm:$0xff]
        %v578 = vld [vmem:[%s571 + $0x30] sm:$0xff]
        %v579 = vld [vmem:[%s571 + $0x38] sm:$0xff]
        %v580 = vmul.f32 %v572, %v400
        %v581 = vmul.f32 %v573, %v400
        %v582 = vmul.f32 %v574, %v400
        %v583 = vmul.f32 %v575, %v400
        %v584 = vmul.f32 %v576, %v400
        %v585 = vmul.f32 %v577, %v400
        %v586 = vmul.f32 %v578, %v400
        %v587 = vmul.f32 %v579, %v400
        %v588 = vadd.f32 %v580, %v414
        %v589 = vadd.f32 %v581, %v414
        %v590 = vadd.f32 %v582, %v414
        %v591 = vadd.f32 %v583, %v414
        %v592 = vadd.f32 %v584, %v414
        %v593 = vadd.f32 %v585, %v414
        %v594 = vadd.f32 %v586, %v414
        %v595 = vadd.f32 %v587, %v414
        %596 = vmatprep.subr.mxu0 0.0
        %597 = vmatpush1.msra.mxu0 %v588
        %598 = vmatprep.subr.mxu0 0.0
        %599 = vmatpush1.msra.mxu0 %v589
        %600 = vmatprep.subr.mxu0 0.0
        %601 = vmatpush1.msra.mxu0 %v590
        %602 = vmatprep.subr.mxu0 0.0
        %603 = vmatpush1.msra.mxu0 %v591
        %604 = vmatprep.subr.mxu0 0.0
        %605 = vmatpush1.msra.mxu0 %v592
        %606 = vmatprep.subr.mxu0 0.0
        %607 = vmatpush1.msra.mxu0 %v593
        %608 = vmatprep.subr.mxu0 0.0
        %609 = vmatpush1.msra.mxu0 %v594
        %610 = vmatprep.subr.mxu0 0.0
        %611 = vmatpush1.msra.mxu0 %v595
        %612 = vmatprep.subr.mxu0 0.0
        %613 = vmatpush1.msra.mxu0 0.0
        %614 = vmatprep.subr.mxu0 0.0
        %615 = vmatpush1.msra.mxu0 0.0
        %616 = vmatprep.subr.mxu0 0.0
        %617 = vmatpush1.msra.mxu0 0.0
        %618 = vmatprep.subr.mxu0 0.0
        %619 = vmatpush1.msra.mxu0 0.0
        %620 = vmatprep.subr.mxu0 0.0
        %621 = vmatpush1.msra.mxu0 0.0
        %622 = vmatprep.subr.mxu0 0.0
        %623 = vmatpush1.msra.mxu0 0.0
        %624 = vmatprep.subr.mxu0 0.0
        %625 = vmatpush1.msra.mxu0 0.0
        %626 = vmatprep.subr.mxu0 0.0
        %627 = vmatpush1.msra.mxu0 0.0
        %628 = vmatprep.subr.mxu0 0.0
        %629 = vmatpush1.msra.mxu0 0.0
        %630 = vmatprep.subr.mxu0 0.0
        %631 = vmatpush1.msra.mxu0 0.0
        %632 = vmatprep.subr.mxu0 0.0
        %633 = vmatpush1.msra.mxu0 0.0
        %634 = vmatprep.subr.mxu0 0.0
        %635 = vmatpush1.msra.mxu0 0.0
        %636 = vmatprep.subr.mxu0 0.0
        %637 = vmatpush1.msra.mxu0 0.0
        %638 = vmatprep.subr.mxu0 0.0
        %639 = vmatpush1.msra.mxu0 0.0
        %640 = vmatprep.subr.mxu0 0.0
        %641 = vmatpush1.msra.mxu0 0.0
        %642 = vmatprep.subr.mxu0 0.0
        %643 = vmatpush1.msra.mxu0 0.0
        %644 = vmatprep.subr.mxu0 0.0
        %645 = vmatpush1.msra.mxu0 0.0
        %646 = vmatprep.subr.mxu0 0.0
        %647 = vmatpush1.msra.mxu0 0.0
        %648 = vmatprep.subr.mxu0 0.0
        %649 = vmatpush1.msra.mxu0 0.0
        %650 = vmatprep.subr.mxu0 0.0
        %651 = vmatpush1.msra.mxu0 0.0
        %652 = vmatprep.subr.mxu0 0.0
        %653 = vmatpush1.msra.mxu0 0.0
        %654 = vmatprep.subr.mxu0 0.0
        %655 = vmatpush1.msra.mxu0 0.0
        %656 = vmatprep.subr.mxu0 0.0
        %657 = vmatpush1.msra.mxu0 0.0
        %658 = vmatprep.subr.mxu0 0.0
        %659 = vmatpush1.msra.mxu0 0.0
        %660 = vmatprep.mubr.f32.mxu0 0.0
        %661 = vmatmul.mubr.f32.gmra.mrb[0].mxu0 %v426
        %v662 = vpop.f32.mrb[0].mxu0
        %v663 = vadd.f32 %v380, %v662
        %v664 = vpop.f32.mrb[0].mxu0
        %665 = vmatprep.mubr.f32.mxu0 0.0
        %666 = vmatmul.mubr.f32.gmra.mrb[0].mxu0 %v429
        %v667 = vpop.f32.mrb[0].mxu0
        %v668 = vadd.f32 %v381, %v667
        %v669 = vpop.f32.mrb[0].mxu0
        %670 = vmatprep.mubr.f32.mxu0 0.0
        %671 = vmatmul.mubr.f32.gmra.mrb[0].mxu0 %v432
        %v672 = vpop.f32.mrb[0].mxu0
        %v673 = vadd.f32 %v382, %v672
        %v674 = vpop.f32.mrb[0].mxu0
        %675 = vmatprep.mubr.f32.mxu0 0.0
        %676 = vmatmul.mubr.f32.gmra.mrb[0].mxu0 %v435
        %v677 = vpop.f32.mrb[0].mxu0
        %v678 = vadd.f32 %v383, %v677
        %v679 = vpop.f32.mrb[0].mxu0
        %680 = vmatprep.mubr.f32.mxu0 0.0
        %681 = vmatmul.mubr.f32.gmra.mrb[0].mxu0 %v438
        %v682 = vpop.f32.mrb[0].mxu0
        %v683 = vadd.f32 %v384, %v682
        %v684 = vpop.f32.mrb[0].mxu0
        %685 = vmatprep.mubr.f32.mxu0 0.0
        %686 = vmatmul.mubr.f32.gmra.mrb[0].mxu0 %v441
        %v687 = vpop.f32.mrb[0].mxu0
        %v688 = vadd.f32 %v385, %v687
        %v689 = vpop.f32.mrb[0].mxu0
        %690 = vmatprep.mubr.f32.mxu0 0.0
        %691 = vmatmul.mubr.f32.gmra.mrb[0].mxu0 %v444
        %v692 = vpop.f32.mrb[0].mxu0
        %v693 = vadd.f32 %v386, %v692
        %v694 = vpop.f32.mrb[0].mxu0
        %695 = vmatprep.mubr.f32.mxu0 0.0
        %696 = vmatmul.mubr.f32.gmra.mrb[0].mxu0 %v447
        %v697 = vpop.f32.mrb[0].mxu0
        %v698 = vadd.f32 %v387, %v697
        %v699 = vpop.f32.mrb[0].mxu0
        %700 = vdwg.mxu0
        %v701 = vadd.f32 %v663, %v572
        %v702 = vadd.f32 %v668, %v573
        %v703 = vadd.f32 %v673, %v574
        %v704 = vadd.f32 %v678, %v575
        %v705 = vadd.f32 %v683, %v576
        %v706 = vadd.f32 %v688, %v577
        %v707 = vadd.f32 %v693, %v578
        %v708 = vadd.f32 %v698, %v579
        %s709 = scalar_lea.vmem %s297, 64 [#allocation5]
        %710 = vst.msk [vmem:[%s709] sm:$0xff] %vm562, %v701
        %711 = vst.msk [vmem:[%s709 + $0x8] sm:$0xff] %vm562, %v702
        %712 = vst.msk [vmem:[%s709 + $0x10] sm:$0xff] %vm562, %v703
        %713 = vst.msk [vmem:[%s709 + $0x18] sm:$0xff] %vm562, %v704
        %714 = vst.msk [vmem:[%s709 + $0x20] sm:$0xff] %vm562, %v705
        %715 = vst.msk [vmem:[%s709 + $0x28] sm:$0xff] %vm562, %v706
        %716 = vst.msk [vmem:[%s709 + $0x30] sm:$0xff] %vm562, %v707
        %717 = vst.msk [vmem:[%s709 + $0x38] sm:$0xff] %vm562, %v708
        %s718 = scalar_lea.vmem %s267, 128 [#allocation2]
        %v719 = vld [vmem:[%s718] sm:$0xff]
        %v720 = vld [vmem:[%s718 + $0x8] sm:$0xff]
        %v721 = vld [vmem:[%s718 + $0x10] sm:$0xff]
        %v722 = vld [vmem:[%s718 + $0x18] sm:$0xff]
        %v723 = vld [vmem:[%s718 + $0x20] sm:$0xff]
        %v724 = vld [vmem:[%s718 + $0x28] sm:$0xff]
        %v725 = vld [vmem:[%s718 + $0x30] sm:$0xff]
        %v726 = vld [vmem:[%s718 + $0x38] sm:$0xff]
        %v727 = vmul.f32 %v719, %v400
        %v728 = vmul.f32 %v720, %v400
        %v729 = vmul.f32 %v721, %v400
        %v730 = vmul.f32 %v722, %v400
        %v731 = vmul.f32 %v723, %v400
        %v732 = vmul.f32 %v724, %v400
        %v733 = vmul.f32 %v725, %v400
        %v734 = vmul.f32 %v726, %v400
        %v735 = vadd.f32 %v727, %v414
        %v736 = vadd.f32 %v728, %v414
        %v737 = vadd.f32 %v729, %v414
        %v738 = vadd.f32 %v730, %v414
        %v739 = vadd.f32 %v731, %v414
        %v740 = vadd.f32 %v732, %v414
        %v741 = vadd.f32 %v733, %v414
        %v742 = vadd.f32 %v734, %v414
        %743 = vmatprep.subr.mxu0 0.0
        %744 = vmatpush1.msra.mxu0 %v735
        %745 = vmatprep.subr.mxu0 0.0
        %746 = vmatpush1.msra.mxu0 %v736
        %747 = vmatprep.subr.mxu0 0.0
        %748 = vmatpush1.msra.mxu0 %v737
        %749 = vmatprep.subr.mxu0 0.0
        %750 = vmatpush1.msra.mxu0 %v738
        %751 = vmatprep.subr.mxu0 0.0
        %752 = vmatpush1.msra.mxu0 %v739
        %753 = vmatprep.subr.mxu0 0.0
        %754 = vmatpush1.msra.mxu0 %v740
        %755 = vmatprep.subr.mxu0 0.0
        %756 = vmatpush1.msra.mxu0 %v741
        %757 = vmatprep.subr.mxu0 0.0
        %758 = vmatpush1.msra.mxu0 %v742
        %759 = vmatprep.subr.mxu0 0.0
        %760 = vmatpush1.msra.mxu0 0.0
        %761 = vmatprep.subr.mxu0 0.0
        %762 = vmatpush1.msra.mxu0 0.0
        %763 = vmatprep.subr.mxu0 0.0
        %764 = vmatpush1.msra.mxu0 0.0
        %765 = vmatprep.subr.mxu0 0.0
        %766 = vmatpush1.msra.mxu0 0.0
        %767 = vmatprep.subr.mxu0 0.0
        %768 = vmatpush1.msra.mxu0 0.0
        %769 = vmatprep.subr.mxu0 0.0
        %770 = vmatpush1.msra.mxu0 0.0
        %771 = vmatprep.subr.mxu0 0.0
        %772 = vmatpush1.msra.mxu0 0.0
        %773 = vmatprep.subr.mxu0 0.0
        %774 = vmatpush1.msra.mxu0 0.0
        %775 = vmatprep.subr.mxu0 0.0
        %776 = vmatpush1.msra.mxu0 0.0
        %777 = vmatprep.subr.mxu0 0.0
        %778 = vmatpush1.msra.mxu0 0.0
        %779 = vmatprep.subr.mxu0 0.0
        %780 = vmatpush1.msra.mxu0 0.0
        %781 = vmatprep.subr.mxu0 0.0
        %782 = vmatpush1.msra.mxu0 0.0
        %783 = vmatprep.subr.mxu0 0.0
        %784 = vmatpush1.msra.mxu0 0.0
        %785 = vmatprep.subr.mxu0 0.0
        %786 = vmatpush1.msra.mxu0 0.0
        %787 = vmatprep.subr.mxu0 0.0
        %788 = vmatpush1.msra.mxu0 0.0
        %789 = vmatprep.subr.mxu0 0.0
        %790 = vmatpush1.msra.mxu0 0.0
        %791 = vmatprep.subr.mxu0 0.0
        %792 = vmatpush1.msra.mxu0 0.0
        %793 = vmatprep.subr.mxu0 0.0
        %794 = vmatpush1.msra.mxu0 0.0
        %795 = vmatprep.subr.mxu0 0.0
        %796 = vmatpush1.msra.mxu0 0.0
        %797 = vmatprep.subr.mxu0 0.0
        %798 = vmatpush1.msra.mxu0 0.0
        %799 = vmatprep.subr.mxu0 0.0
        %800 = vmatpush1.msra.mxu0 0.0
        %801 = vmatprep.subr.mxu0 0.0
        %802 = vmatpush1.msra.mxu0 0.0
        %803 = vmatprep.subr.mxu0 0.0
        %804 = vmatpush1.msra.mxu0 0.0
        %805 = vmatprep.subr.mxu0 0.0
        %806 = vmatpush1.msra.mxu0 0.0
        %807 = vmatprep.mubr.f32.mxu0 0.0
        %808 = vmatmul.mubr.f32.gmra.mrb[0].mxu0 %v426
        %v809 = vpop.f32.mrb[0].mxu0
        %v810 = vadd.f32 %v380, %v809
        %v811 = vpop.f32.mrb[0].mxu0
        %812 = vmatprep.mubr.f32.mxu0 0.0
        %813 = vmatmul.mubr.f32.gmra.mrb[0].mxu0 %v429
        %v814 = vpop.f32.mrb[0].mxu0
        %v815 = vadd.f32 %v381, %v814
        %v816 = vpop.f32.mrb[0].mxu0
        %817 = vmatprep.mubr.f32.mxu0 0.0
        %818 = vmatmul.mubr.f32.gmra.mrb[0].mxu0 %v432
        %v819 = vpop.f32.mrb[0].mxu0
        %v820 = vadd.f32 %v382, %v819
        %v821 = vpop.f32.mrb[0].mxu0
        %822 = vmatprep.mubr.f32.mxu0 0.0
        %823 = vmatmul.mubr.f32.gmra.mrb[0].mxu0 %v435
        %v824 = vpop.f32.mrb[0].mxu0
        %v825 = vadd.f32 %v383, %v824
        %v826 = vpop.f32.mrb[0].mxu0
        %827 = vmatprep.mubr.f32.mxu0 0.0
        %828 = vmatmul.mubr.f32.gmra.mrb[0].mxu0 %v438
        %v829 = vpop.f32.mrb[0].mxu0
        %v830 = vadd.f32 %v384, %v829
        %v831 = vpop.f32.mrb[0].mxu0
        %832 = vmatprep.mubr.f32.mxu0 0.0
        %833 = vmatmul.mubr.f32.gmra.mrb[0].mxu0 %v441
        %v834 = vpop.f32.mrb[0].mxu0
        %v835 = vadd.f32 %v385, %v834
        %v836 = vpop.f32.mrb[0].mxu0
        %837 = vmatprep.mubr.f32.mxu0 0.0
        %838 = vmatmul.mubr.f32.gmra.mrb[0].mxu0 %v444
        %v839 = vpop.f32.mrb[0].mxu0
        %v840 = vadd.f32 %v386, %v839
        %v841 = vpop.f32.mrb[0].mxu0
        %842 = vmatprep.mubr.f32.mxu0 0.0
        %843 = vmatmul.mubr.f32.gmra.mrb[0].mxu0 %v447
        %v844 = vpop.f32.mrb[0].mxu0
        %v845 = vadd.f32 %v387, %v844
        %v846 = vpop.f32.mrb[0].mxu0
        %847 = vdwg.mxu0
        %v848 = vadd.f32 %v810, %v719
        %v849 = vadd.f32 %v815, %v720
        %v850 = vadd.f32 %v820, %v721
        %v851 = vadd.f32 %v825, %v722
        %v852 = vadd.f32 %v830, %v723
        %v853 = vadd.f32 %v835, %v724
        %v854 = vadd.f32 %v840, %v725
        %v855 = vadd.f32 %v845, %v726
        %s856 = scalar_lea.vmem %s297, 128 [#allocation5]
        %857 = vst.msk [vmem:[%s856] sm:$0xff] %vm562, %v848
        %858 = vst.msk [vmem:[%s856 + $0x8] sm:$0xff] %vm562, %v849
        %859 = vst.msk [vmem:[%s856 + $0x10] sm:$0xff] %vm562, %v850
        %860 = vst.msk [vmem:[%s856 + $0x18] sm:$0xff] %vm562, %v851
        %861 = vst.msk [vmem:[%s856 + $0x20] sm:$0xff] %vm562, %v852
        %862 = vst.msk [vmem:[%s856 + $0x28] sm:$0xff] %vm562, %v853
        %863 = vst.msk [vmem:[%s856 + $0x30] sm:$0xff] %vm562, %v854
        %864 = vst.msk [vmem:[%s856 + $0x38] sm:$0xff] %vm562, %v855
        %s865 = scalar_lea.vmem %s267, 192 [#allocation2]
        %v866 = vld [vmem:[%s865] sm:$0xff]
        %v867 = vld [vmem:[%s865 + $0x8] sm:$0xff]
        %v868 = vld [vmem:[%s865 + $0x10] sm:$0xff]
        %v869 = vld [vmem:[%s865 + $0x18] sm:$0xff]
        %v870 = vld [vmem:[%s865 + $0x20] sm:$0xff]
        %v871 = vld [vmem:[%s865 + $0x28] sm:$0xff]
        %v872 = vld [vmem:[%s865 + $0x30] sm:$0xff]
        %v873 = vld [vmem:[%s865 + $0x38] sm:$0xff]
        %v874 = vmul.f32 %v866, %v400
        %v875 = vmul.f32 %v867, %v400
        %v876 = vmul.f32 %v868, %v400
        %v877 = vmul.f32 %v869, %v400
        %v878 = vmul.f32 %v870, %v400
        %v879 = vmul.f32 %v871, %v400
        %v880 = vmul.f32 %v872, %v400
        %v881 = vmul.f32 %v873, %v400
        %v882 = vadd.f32 %v874, %v414
        %v883 = vadd.f32 %v875, %v414
        %v884 = vadd.f32 %v876, %v414
        %v885 = vadd.f32 %v877, %v414
        %v886 = vadd.f32 %v878, %v414
        %v887 = vadd.f32 %v879, %v414
        %v888 = vadd.f32 %v880, %v414
        %v889 = vadd.f32 %v881, %v414
        %890 = vmatprep.subr.mxu0 0.0
        %891 = vmatpush1.msra.mxu0 %v882
        %892 = vmatprep.subr.mxu0 0.0
        %893 = vmatpush1.msra.mxu0 %v883
        %894 = vmatprep.subr.mxu0 0.0
        %895 = vmatpush1.msra.mxu0 %v884
        %896 = vmatprep.subr.mxu0 0.0
        %897 = vmatpush1.msra.mxu0 %v885
        %898 = vmatprep.subr.mxu0 0.0
        %899 = vmatpush1.msra.mxu0 %v886
        %900 = vmatprep.subr.mxu0 0.0
        %901 = vmatpush1.msra.mxu0 %v887
        %902 = vmatprep.subr.mxu0 0.0
        %903 = vmatpush1.msra.mxu0 %v888
        %904 = vmatprep.subr.mxu0 0.0
        %905 = vmatpush1.msra.mxu0 %v889
        %906 = vmatprep.subr.mxu0 0.0
        %907 = vmatpush1.msra.mxu0 0.0
        %908 = vmatprep.subr.mxu0 0.0
        %909 = vmatpush1.msra.mxu0 0.0
        %910 = vmatprep.subr.mxu0 0.0
        %911 = vmatpush1.msra.mxu0 0.0
        %912 = vmatprep.subr.mxu0 0.0
        %913 = vmatpush1.msra.mxu0 0.0
        %914 = vmatprep.subr.mxu0 0.0
        %915 = vmatpush1.msra.mxu0 0.0
        %916 = vmatprep.subr.mxu0 0.0
        %917 = vmatpush1.msra.mxu0 0.0
        %918 = vmatprep.subr.mxu0 0.0
        %919 = vmatpush1.msra.mxu0 0.0
        %920 = vmatprep.subr.mxu0 0.0
        %921 = vmatpush1.msra.mxu0 0.0
        %922 = vmatprep.subr.mxu0 0.0
        %923 = vmatpush1.msra.mxu0 0.0
        %924 = vmatprep.subr.mxu0 0.0
        %925 = vmatpush1.msra.mxu0 0.0
        %926 = vmatprep.subr.mxu0 0.0
        %927 = vmatpush1.msra.mxu0 0.0
        %928 = vmatprep.subr.mxu0 0.0
        %929 = vmatpush1.msra.mxu0 0.0
        %930 = vmatprep.subr.mxu0 0.0
        %931 = vmatpush1.msra.mxu0 0.0
        %932 = vmatprep.subr.mxu0 0.0
        %933 = vmatpush1.msra.mxu0 0.0
        %934 = vmatprep.subr.mxu0 0.0
        %935 = vmatpush1.msra.mxu0 0.0
        %936 = vmatprep.subr.mxu0 0.0
        %937 = vmatpush1.msra.mxu0 0.0
        %938 = vmatprep.subr.mxu0 0.0
        %939 = vmatpush1.msra.mxu0 0.0
        %940 = vmatprep.subr.mxu0 0.0
        %941 = vmatpush1.msra.mxu0 0.0
        %942 = vmatprep.subr.mxu0 0.0
        %943 = vmatpush1.msra.mxu0 0.0
        %944 = vmatprep.subr.mxu0 0.0
        %945 = vmatpush1.msra.mxu0 0.0
        %946 = vmatprep.subr.mxu0 0.0
        %947 = vmatpush1.msra.mxu0 0.0
        %948 = vmatprep.subr.mxu0 0.0
        %949 = vmatpush1.msra.mxu0 0.0
        %950 = vmatprep.subr.mxu0 0.0
        %951 = vmatpush1.msra.mxu0 0.0
        %952 = vmatprep.subr.mxu0 0.0
        %953 = vmatpush1.msra.mxu0 0.0
        %954 = vmatprep.mubr.f32.mxu0 0.0
        %955 = vmatmul.mubr.f32.gmra.mrb[0].mxu0 %v426
        %v956 = vpop.f32.mrb[0].mxu0
        %v957 = vadd.f32 %v380, %v956
        %v958 = vpop.f32.mrb[0].mxu0
        %959 = vmatprep.mubr.f32.mxu0 0.0
        %960 = vmatmul.mubr.f32.gmra.mrb[0].mxu0 %v429
        %v961 = vpop.f32.mrb[0].mxu0
        %v962 = vadd.f32 %v381, %v961
        %v963 = vpop.f32.mrb[0].mxu0
        %964 = vmatprep.mubr.f32.mxu0 0.0
        %965 = vmatmul.mubr.f32.gmra.mrb[0].mxu0 %v432
        %v966 = vpop.f32.mrb[0].mxu0
        %v967 = vadd.f32 %v382, %v966
        %v968 = vpop.f32.mrb[0].mxu0
        %969 = vmatprep.mubr.f32.mxu0 0.0
        %970 = vmatmul.mubr.f32.gmra.mrb[0].mxu0 %v435
        %v971 = vpop.f32.mrb[0].mxu0
        %v972 = vadd.f32 %v383, %v971
        %v973 = vpop.f32.mrb[0].mxu0
        %974 = vmatprep.mubr.f32.mxu0 0.0
        %975 = vmatmul.mubr.f32.gmra.mrb[0].mxu0 %v438
        %v976 = vpop.f32.mrb[0].mxu0
        %v977 = vadd.f32 %v384, %v976
        %v978 = vpop.f32.mrb[0].mxu0
        %979 = vmatprep.mubr.f32.mxu0 0.0
        %980 = vmatmul.mubr.f32.gmra.mrb[0].mxu0 %v441
        %v981 = vpop.f32.mrb[0].mxu0
        %v982 = vadd.f32 %v385, %v981
        %v983 = vpop.f32.mrb[0].mxu0
        %984 = vmatprep.mubr.f32.mxu0 0.0
        %985 = vmatmul.mubr.f32.gmra.mrb[0].mxu0 %v444
        %v986 = vpop.f32.mrb[0].mxu0
        %v987 = vadd.f32 %v386, %v986
        %v988 = vpop.f32.mrb[0].mxu0
        %989 = vmatprep.mubr.f32.mxu0 0.0
        %990 = vmatmul.mubr.f32.gmra.mrb[0].mxu0 %v447
        %v991 = vpop.f32.mrb[0].mxu0
        %v992 = vadd.f32 %v387, %v991
        %v993 = vpop.f32.mrb[0].mxu0
        %994 = vdwg.mxu0
        %v995 = vadd.f32 %v957, %v866
        %v996 = vadd.f32 %v962, %v867
        %v997 = vadd.f32 %v967, %v868
        %v998 = vadd.f32 %v972, %v869
        %v999 = vadd.f32 %v977, %v870
        %v1000 = vadd.f32 %v982, %v871
        %v1001 = vadd.f32 %v987, %v872
        %v1002 = vadd.f32 %v992, %v873
        %s1003 = scalar_lea.vmem %s297, 192 [#allocation5]
        %1004 = vst.msk [vmem:[%s1003] sm:$0xff] %vm562, %v995
        %1005 = vst.msk [vmem:[%s1003 + $0x8] sm:$0xff] %vm562, %v996
        %1006 = vst.msk [vmem:[%s1003 + $0x10] sm:$0xff] %vm562, %v997
        %1007 = vst.msk [vmem:[%s1003 + $0x18] sm:$0xff] %vm562, %v998
        %1008 = vst.msk [vmem:[%s1003 + $0x20] sm:$0xff] %vm562, %v999
        %1009 = vst.msk [vmem:[%s1003 + $0x28] sm:$0xff] %vm562, %v1000
        %1010 = vst.msk [vmem:[%s1003 + $0x30] sm:$0xff] %vm562, %v1001
        %1011 = vst.msk [vmem:[%s1003 + $0x38] sm:$0xff] %vm562, %v1002
        %s1012 = sand.u32 %s184, 1
        %s1013 = scalar_lea.sflag [#allocation4], %s1012
        %s1014 = sand.u32 %s184, 1
        %s1015 = smul.addr %s1014, 256
        %s1016 = scalar_lea.vmem [#allocation5], %s1015
        // Predicated region
        $region53: #{cross_patch_sublayer.1} parent=47 // pred_check
          %p1017 = pneg %p194
        $region54: #{cross_patch_sublayer.1} parent=47 // pred_check_branch
          %1019 = sbr.rel (%p1017) target = $region56
        $region55: #{cross_patch_sublayer.1} parent=47 // pred_region
          %s1020 = smul.u32 4, %s24
          %s1022 = ssub.s32 4096, 4096
          %1023 = vsyncadd %s1013, %s1022
          %s1024 = smul.addr %s1020, 8
          %s1025 = smul.addr %s1024, 128
          %s1026 = scalar_lea.hbm %s7, %s1025
          %s1027 = sshll.u32 %s1016, 4
          %s1028 = int_to_ptr.vmem [resolvable:$true] %s1027
          %1033 = dma.vmem_to_hbm [thread:$0]  %s1028, 4096, %s1026, %s1013, 128, 128, 8
        $region56: #{cross_patch_sublayer.1} parent=47 // pred_fallthru
          _
      $region48: #{cross_patch_sublayer.1} parent=5 // pred_fallthru
        _
      %p1034 = scmp.le.s32.totalorder 2, %s19
      // Predicated region
      $region57: #{cross_patch_sublayer.1} parent=5 // pred_check
        %p1035 = pneg %p1034
      $region58: #{cross_patch_sublayer.1} parent=5 // pred_check_branch
        %1037 = sbr.rel (%p1035) target = $region60
      $region59: #{cross_patch_sublayer.1} parent=5 // pred_region
        %s1038 = ssub.s32 %s19, 2
        // Predicated region
        $region61: #{cross_patch_sublayer.1} parent=59 // pred_check
          %p1039 = pneg %p200
        $region62: #{cross_patch_sublayer.1} parent=59 // pred_check_branch
          %1041 = sbr.rel (%p1039) target = $region64
        $region63: #{cross_patch_sublayer.1} parent=59 // pred_region
          %s1042 = sand.u32 %s185, 1
          %s1043 = scalar_lea.sflag [#allocation4], %s1042
          %s1044 = sand.u32 %s185, 1
          %s1045 = smul.addr %s1044, 256
          %s1046 = scalar_lea.vmem [#allocation5], %s1045
          %1047 = dma.done %s1043, 4096
        $region64: #{cross_patch_sublayer.1} parent=59 // pred_fallthru
          _
      $region60: #{cross_patch_sublayer.1} parent=5 // pred_fallthru
        _
    $region6: #{cross_patch_sublayer.1} parent=1 // loop_footer
      %s23 = sadd.s32 1, %s19
    $region7: #{cross_patch_sublayer.1} parent=1 // loop_footer_branch
      %18 = sbr.rel target = $region3
    $region8: #{cross_patch_sublayer.1} parent=1 // loop_exit
      _
    %1048 = vsyncpa [#allocation3], 1
    %s1049 = scalar_lea.sflag [#allocation3], 1
    %1050 = vsyncpa %s1049, 1
    %1051 = vsyncpa [#allocation4], 1
    %s1052 = scalar_lea.sflag [#allocation4], 1
    %1053 = vsyncpa %s1052, 1

</llo_original>
